<compile_context>
chip_gen: v5e
topology: v5e:2x2
jax: 0.10.0
libtpu: 0.0.40
codegen_flags: <defaults>
</compile_context>

<pallas_src>
import functools

import jax
import jax.numpy as jnp
from jax.experimental import pallas as pl
from jax.experimental.pallas import tpu as pltpu

# ----------------------------- config (small, deterministic) ---------------
SEQ = 8        # sequence length
BATCH = 2      # batch size
ZDIM = 16      # args.z_dim   (RNN input size)
HIDDEN = 32    # args.hidden_dim
NLAYERS = 2    # args.num_layer


# ----------------------------- Pallas kernel -------------------------------
def encoder_kernel(x_ref, wih0_ref, wihr_ref, whh_ref, b_ref, wfc_ref, bfc_ref,
                   out_ref, *, num_layers, seq, batch):
    """Stacked-RNN recurrence + final Linear, fully vreg-resident.

    x_ref    : (S*B, Z)        input sequence, flattened over (seq, batch)
    wih0_ref : (Z, H)          layer-0 input->hidden weight (pre-transposed)
    wihr_ref : (max(L-1,1),H,H) layers 1..L-1 input->hidden weights
    whh_ref  : (L, H, H)       hidden->hidden weights (pre-transposed)
    b_ref    : (L, 1, H)       b_ih + b_hh per layer
    wfc_ref  : (H, H)          fc weight (pre-transposed)
    bfc_ref  : (1, H)          fc bias
    out_ref  : (S*B, H)        output (single dense store)
    """
    hidden = whh_ref.shape[-1]

    # ---- Layer 0: hoisted, time-independent input projection (one matmul).
    pre0 = (jnp.dot(x_ref[...], wih0_ref[...],
                    preferred_element_type=jnp.float32)
            + b_ref[0])                                      # (S*B, H) value

    # ---- Stacked recurrence: fully unrolled, state kept in vregs.
    # Layers >= 1 project their input per-timestep from h_{l-1, t}, so the
    # dependence graph wavefronts across layers and the scheduler can overlap
    # the independent per-step MXU dots of different layers.
    prev_outs = None                       # list of (batch, H) values, layer l-1
    for layer in range(num_layers):
        w_hh = whh_ref[layer]                                # (H, H) value
        if layer == 0:
            w_in = None
            bias = None
        else:
            w_in = wihr_ref[layer - 1]                       # (H, H) value
            # Hoist the bias broadcast out of the time loop (no per-iter
            # broadcast_in_dim).
            bias = jnp.broadcast_to(b_ref[layer], (batch, hidden))

        outs = []
        h = None                                             # h_{-1} == 0
        for t in range(seq):
            if layer == 0:
                z = pre0[t * batch:(t + 1) * batch, :]       # static value slice
            else:
                z = (jnp.dot(prev_outs[t], w_in,
                             preferred_element_type=jnp.float32) + bias)
            if h is None:
                # t == 0: previous hidden state is zero -> skip dead h@W_hh.
                h = jnp.tanh(z)
            else:
                h = jnp.tanh(z + jnp.dot(h, w_hh,
                                         preferred_element_type=jnp.float32))
            outs.append(h)
        prev_outs = outs

    # ---- Final Linear: one matmul over all timesteps + single dense store.
    h_all = jnp.concatenate(prev_outs, axis=0)               # (S*B, H)
    out_ref[...] = (jnp.dot(h_all, wfc_ref[...],
                            preferred_element_type=jnp.float32)
                    + bfc_ref[...])


def encoder_forward(x, w_ih0, w_ih_rest, w_hh, b_sum, w_fc, b_fc):
    """x: (S, B, Z) float32 -> (S, B, H) float32."""
    seq, batch, zdim = x.shape
    hidden = w_hh.shape[-1]
    num_layers = w_hh.shape[0]
    x2d = x.reshape(seq * batch, zdim)

    sb = seq * batch
    flops = (2 * sb * zdim * hidden                          # layer-0 projection
             + 2 * sb * hidden * hidden * (num_layers - 1)   # layer>=1 projections
             + 2 * sb * hidden * hidden * num_layers         # recurrences
             + 2 * sb * hidden * hidden)                     # final fc
    transcendentals = sb * hidden * num_layers               # tanh
    bytes_accessed = 4 * (x2d.size + w_ih0.size + w_ih_rest.size + w_hh.size
                          + b_sum.size + w_fc.size + b_fc.size + sb * hidden)

    kernel = functools.partial(encoder_kernel, num_layers=num_layers,
                               seq=seq, batch=batch)
    out2d = pl.pallas_call(
        kernel,
        out_shape=jax.ShapeDtypeStruct((sb, hidden), jnp.float32),
        in_specs=[pl.BlockSpec(memory_space=pltpu.MemorySpace.VMEM)] * 7,
        out_specs=pl.BlockSpec(memory_space=pltpu.MemorySpace.VMEM),
        cost_estimate=pl.CostEstimate(flops=int(flops),
                                      transcendentals=int(transcendentals),
                                      bytes_accessed=int(bytes_accessed)),
    )(x2d, w_ih0, w_ih_rest, w_hh, b_sum, w_fc, b_fc)
    return out2d.reshape(seq, batch, hidden)


# ----------------------------- pure-JAX reference ---------------------------
def encoder_reference(x, w_ih0, w_ih_rest, w_hh, b_sum, w_fc, b_fc):
    seq, batch, _ = x.shape
    hidden = w_hh.shape[-1]
    h_seq = x
    for layer in range(w_hh.shape[0]):
        w_in = w_ih0 if layer == 0 else w_ih_rest[layer - 1]
        h = jnp.zeros((batch, hidden), jnp.float32)
        outs = []
        for t in range(seq):
            h = jnp.tanh(h_seq[t] @ w_in + h @ w_hh[layer] + b_sum[layer])
            outs.append(h)
        h_seq = jnp.stack(outs, axis=0)
    return h_seq @ w_fc + b_fc


# ----------------------------- parameter init -------------------------------
def init_params(key, zdim, hidden, nlayers):
    # PyTorch-style uniform(-1/sqrt(H), 1/sqrt(H)) init, deterministic from key.
    bound = 1.0 / (hidden ** 0.5)
    keys = jax.random.split(key, 4 * nlayers + 2)

    # Layer 0 input->hidden: (Z, H); layers 1..L-1: (H, H).
    w_ih0 = jax.random.uniform(keys[0], (zdim, hidden), jnp.float32,
                               -bound, bound)
    if nlayers > 1:
        w_ih_rest = jnp.stack([
            jax.random.uniform(keys[4 * l + 0], (hidden, hidden), jnp.float32,
                               -bound, bound) for l in range(1, nlayers)])
    else:
        w_ih_rest = jnp.zeros((1, hidden, hidden), jnp.float32)  # unused dummy

    w_hh = jnp.stack([
        jax.random.uniform(keys[4 * l + 1], (hidden, hidden), jnp.float32,
                           -bound, bound) for l in range(nlayers)])
    b_ih = jnp.stack([
        jax.random.uniform(keys[4 * l + 2], (1, hidden), jnp.float32,
                           -bound, bound) for l in range(nlayers)])
    b_hh = jnp.stack([
        jax.random.uniform(keys[4 * l + 3], (1, hidden), jnp.float32,
                           -bound, bound) for l in range(nlayers)])
    b_sum = b_ih + b_hh  # (L, 1, H)

    w_fc = jax.random.uniform(keys[-2], (hidden, hidden), jnp.float32,
                              -bound, bound)
    b_fc = jax.random.uniform(keys[-1], (1, hidden), jnp.float32,
                              -bound, bound)
    return w_ih0, w_ih_rest, w_hh, b_sum, w_fc, b_fc


# ----------------------------- main -----------------------------------------
if __name__ == "__main__":
    key = jax.random.PRNGKey(0)
    k_x, k_p = jax.random.split(key)

    x = jax.random.normal(k_x, (SEQ, BATCH, ZDIM), jnp.float32)
    params = init_params(k_p, ZDIM, HIDDEN, NLAYERS)

    out = encoder_forward(x, *params)
    out = jax.block_until_ready(out)

    ref = encoder_reference(x, *params)
    assert out.shape == (SEQ, BATCH, HIDDEN)
    assert jnp.allclose(out, ref, rtol=1e-5, atol=1e-5), "mismatch vs JAX reference"

    print("KERNEL_OK")
</pallas_src>

<mosaic_0001>
module attributes {stable_mosaic.version = 11 : i64} {
  func.func @encoder_kernel(%arg0: memref<16x16xf32, #tpu.memory_space<vmem>>, %arg1: memref<16x32xf32, #tpu.memory_space<vmem>>, %arg2: memref<1x32x32xf32, #tpu.memory_space<vmem>>, %arg3: memref<2x32x32xf32, #tpu.memory_space<vmem>>, %arg4: memref<2x1x32xf32, #tpu.memory_space<vmem>>, %arg5: memref<32x32xf32, #tpu.memory_space<vmem>>, %arg6: memref<1x32xf32, #tpu.memory_space<vmem>>, %arg7: memref<16x32xf32, #tpu.memory_space<vmem>>) attributes {dimension_semantics = [], scalar_prefetch = 0 : i64, scratch_operands = 0 : i64, tpu.core_type = #tpu.core_type<tc>} {
    %c0 = arith.constant 0 : index
    %c0_0 = arith.constant 0 : index
    %0 = vector.load %arg0[%c0, %c0_0] : memref<16x16xf32, #tpu.memory_space<vmem>>, vector<16x16xf32>
    %c0_1 = arith.constant 0 : index
    %c0_2 = arith.constant 0 : index
    %1 = vector.load %arg1[%c0_1, %c0_2] : memref<16x32xf32, #tpu.memory_space<vmem>>, vector<16x32xf32>
    %cst = arith.constant dense<0.000000e+00> : vector<16x32xf32>
    %2 = tpu.matmul %0, %1, %cst {dimension_numbers = #tpu.dot_dimension_numbers<[1], [0], [0], [1], [0, 0, 1, 1], [], []>} : vector<16x16xf32>, vector<16x32xf32>, vector<16x32xf32> -> vector<16x32xf32>
    %c0_3 = arith.constant 0 : index
    %c0_4 = arith.constant 0 : index
    %c0_5 = arith.constant 0 : index
    %3 = vector.load %arg4[%c0_3, %c0_4, %c0_5] : memref<2x1x32xf32, #tpu.memory_space<vmem>>, vector<1x1x32xf32>
    %4 = vector.shape_cast %3 : vector<1x1x32xf32> to vector<1x32xf32>
    %5 = vector.broadcast %4 : vector<1x32xf32> to vector<16x32xf32>
    %6 = arith.addf %2, %5 : vector<16x32xf32>
    %c0_6 = arith.constant 0 : index
    %c0_7 = arith.constant 0 : index
    %c0_8 = arith.constant 0 : index
    %7 = vector.load %arg3[%c0_6, %c0_7, %c0_8] : memref<2x32x32xf32, #tpu.memory_space<vmem>>, vector<1x32x32xf32>
    %8 = vector.shape_cast %7 : vector<1x32x32xf32> to vector<32x32xf32>
    %9 = vector.extract_strided_slice %6 {offsets = [0, 0], sizes = [2, 32], strides = [1, 1]} : vector<16x32xf32> to vector<2x32xf32>
    %10 = math.tanh %9 : vector<2x32xf32>
    %11 = vector.extract_strided_slice %6 {offsets = [2, 0], sizes = [2, 32], strides = [1, 1]} : vector<16x32xf32> to vector<2x32xf32>
    %cst_9 = arith.constant dense<0.000000e+00> : vector<2x32xf32>
    %12 = tpu.matmul %10, %8, %cst_9 {dimension_numbers = #tpu.dot_dimension_numbers<[1], [0], [0], [1], [0, 0, 1, 1], [], []>} : vector<2x32xf32>, vector<32x32xf32>, vector<2x32xf32> -> vector<2x32xf32>
    %13 = arith.addf %11, %12 : vector<2x32xf32>
    %14 = math.tanh %13 : vector<2x32xf32>
    %15 = vector.extract_strided_slice %6 {offsets = [4, 0], sizes = [2, 32], strides = [1, 1]} : vector<16x32xf32> to vector<2x32xf32>
    %cst_10 = arith.constant dense<0.000000e+00> : vector<2x32xf32>
    %16 = tpu.matmul %14, %8, %cst_10 {dimension_numbers = #tpu.dot_dimension_numbers<[1], [0], [0], [1], [0, 0, 1, 1], [], []>} : vector<2x32xf32>, vector<32x32xf32>, vector<2x32xf32> -> vector<2x32xf32>
    %17 = arith.addf %15, %16 : vector<2x32xf32>
    %18 = math.tanh %17 : vector<2x32xf32>
    %19 = vector.extract_strided_slice %6 {offsets = [6, 0], sizes = [2, 32], strides = [1, 1]} : vector<16x32xf32> to vector<2x32xf32>
    %cst_11 = arith.constant dense<0.000000e+00> : vector<2x32xf32>
    %20 = tpu.matmul %18, %8, %cst_11 {dimension_numbers = #tpu.dot_dimension_numbers<[1], [0], [0], [1], [0, 0, 1, 1], [], []>} : vector<2x32xf32>, vector<32x32xf32>, vector<2x32xf32> -> vector<2x32xf32>
    %21 = arith.addf %19, %20 : vector<2x32xf32>
    %22 = math.tanh %21 : vector<2x32xf32>
    %23 = vector.extract_strided_slice %6 {offsets = [8, 0], sizes = [2, 32], strides = [1, 1]} : vector<16x32xf32> to vector<2x32xf32>
    %cst_12 = arith.constant dense<0.000000e+00> : vector<2x32xf32>
    %24 = tpu.matmul %22, %8, %cst_12 {dimension_numbers = #tpu.dot_dimension_numbers<[1], [0], [0], [1], [0, 0, 1, 1], [], []>} : vector<2x32xf32>, vector<32x32xf32>, vector<2x32xf32> -> vector<2x32xf32>
    %25 = arith.addf %23, %24 : vector<2x32xf32>
    %26 = math.tanh %25 : vector<2x32xf32>
    %27 = vector.extract_strided_slice %6 {offsets = [10, 0], sizes = [2, 32], strides = [1, 1]} : vector<16x32xf32> to vector<2x32xf32>
    %cst_13 = arith.constant dense<0.000000e+00> : vector<2x32xf32>
    %28 = tpu.matmul %26, %8, %cst_13 {dimension_numbers = #tpu.dot_dimension_numbers<[1], [0], [0], [1], [0, 0, 1, 1], [], []>} : vector<2x32xf32>, vector<32x32xf32>, vector<2x32xf32> -> vector<2x32xf32>
    %29 = arith.addf %27, %28 : vector<2x32xf32>
    %30 = math.tanh %29 : vector<2x32xf32>
    %31 = vector.extract_strided_slice %6 {offsets = [12, 0], sizes = [2, 32], strides = [1, 1]} : vector<16x32xf32> to vector<2x32xf32>
    %cst_14 = arith.constant dense<0.000000e+00> : vector<2x32xf32>
    %32 = tpu.matmul %30, %8, %cst_14 {dimension_numbers = #tpu.dot_dimension_numbers<[1], [0], [0], [1], [0, 0, 1, 1], [], []>} : vector<2x32xf32>, vector<32x32xf32>, vector<2x32xf32> -> vector<2x32xf32>
    %33 = arith.addf %31, %32 : vector<2x32xf32>
    %34 = math.tanh %33 : vector<2x32xf32>
    %35 = vector.extract_strided_slice %6 {offsets = [14, 0], sizes = [2, 32], strides = [1, 1]} : vector<16x32xf32> to vector<2x32xf32>
    %cst_15 = arith.constant dense<0.000000e+00> : vector<2x32xf32>
    %36 = tpu.matmul %34, %8, %cst_15 {dimension_numbers = #tpu.dot_dimension_numbers<[1], [0], [0], [1], [0, 0, 1, 1], [], []>} : vector<2x32xf32>, vector<32x32xf32>, vector<2x32xf32> -> vector<2x32xf32>
    %37 = arith.addf %35, %36 : vector<2x32xf32>
    %38 = math.tanh %37 : vector<2x32xf32>
    %c1 = arith.constant 1 : index
    %c0_16 = arith.constant 0 : index
    %c0_17 = arith.constant 0 : index
    %39 = vector.load %arg3[%c1, %c0_16, %c0_17] : memref<2x32x32xf32, #tpu.memory_space<vmem>>, vector<1x32x32xf32>
    %40 = vector.shape_cast %39 : vector<1x32x32xf32> to vector<32x32xf32>
    %c0_18 = arith.constant 0 : index
    %c0_19 = arith.constant 0 : index
    %c0_20 = arith.constant 0 : index
    %41 = vector.load %arg2[%c0_18, %c0_19, %c0_20] : memref<1x32x32xf32, #tpu.memory_space<vmem>>, vector<1x32x32xf32>
    %42 = vector.shape_cast %41 : vector<1x32x32xf32> to vector<32x32xf32>
    %c1_21 = arith.constant 1 : index
    %c0_22 = arith.constant 0 : index
    %c0_23 = arith.constant 0 : index
    %43 = vector.load %arg4[%c1_21, %c0_22, %c0_23] : memref<2x1x32xf32, #tpu.memory_space<vmem>>, vector<1x1x32xf32>
    %44 = vector.shape_cast %43 : vector<1x1x32xf32> to vector<1x32xf32>
    %45 = vector.shape_cast %44 : vector<1x32xf32> to vector<1x32xf32>
    %46 = vector.broadcast %45 : vector<1x32xf32> to vector<2x32xf32>
    %cst_24 = arith.constant dense<0.000000e+00> : vector<2x32xf32>
    %47 = tpu.matmul %10, %42, %cst_24 {dimension_numbers = #tpu.dot_dimension_numbers<[1], [0], [0], [1], [0, 0, 1, 1], [], []>} : vector<2x32xf32>, vector<32x32xf32>, vector<2x32xf32> -> vector<2x32xf32>
    %48 = arith.addf %47, %46 : vector<2x32xf32>
    %49 = math.tanh %48 : vector<2x32xf32>
    %cst_25 = arith.constant dense<0.000000e+00> : vector<2x32xf32>
    %50 = tpu.matmul %14, %42, %cst_25 {dimension_numbers = #tpu.dot_dimension_numbers<[1], [0], [0], [1], [0, 0, 1, 1], [], []>} : vector<2x32xf32>, vector<32x32xf32>, vector<2x32xf32> -> vector<2x32xf32>
    %51 = arith.addf %50, %46 : vector<2x32xf32>
    %cst_26 = arith.constant dense<0.000000e+00> : vector<2x32xf32>
    %52 = tpu.matmul %49, %40, %cst_26 {dimension_numbers = #tpu.dot_dimension_numbers<[1], [0], [0], [1], [0, 0, 1, 1], [], []>} : vector<2x32xf32>, vector<32x32xf32>, vector<2x32xf32> -> vector<2x32xf32>
    %53 = arith.addf %51, %52 : vector<2x32xf32>
    %54 = math.tanh %53 : vector<2x32xf32>
    %cst_27 = arith.constant dense<0.000000e+00> : vector<2x32xf32>
    %55 = tpu.matmul %18, %42, %cst_27 {dimension_numbers = #tpu.dot_dimension_numbers<[1], [0], [0], [1], [0, 0, 1, 1], [], []>} : vector<2x32xf32>, vector<32x32xf32>, vector<2x32xf32> -> vector<2x32xf32>
    %56 = arith.addf %55, %46 : vector<2x32xf32>
    %cst_28 = arith.constant dense<0.000000e+00> : vector<2x32xf32>
    %57 = tpu.matmul %54, %40, %cst_28 {dimension_numbers = #tpu.dot_dimension_numbers<[1], [0], [0], [1], [0, 0, 1, 1], [], []>} : vector<2x32xf32>, vector<32x32xf32>, vector<2x32xf32> -> vector<2x32xf32>
    %58 = arith.addf %56, %57 : vector<2x32xf32>
    %59 = math.tanh %58 : vector<2x32xf32>
    %cst_29 = arith.constant dense<0.000000e+00> : vector<2x32xf32>
    %60 = tpu.matmul %22, %42, %cst_29 {dimension_numbers = #tpu.dot_dimension_numbers<[1], [0], [0], [1], [0, 0, 1, 1], [], []>} : vector<2x32xf32>, vector<32x32xf32>, vector<2x32xf32> -> vector<2x32xf32>
    %61 = arith.addf %60, %46 : vector<2x32xf32>
    %cst_30 = arith.constant dense<0.000000e+00> : vector<2x32xf32>
    %62 = tpu.matmul %59, %40, %cst_30 {dimension_numbers = #tpu.dot_dimension_numbers<[1], [0], [0], [1], [0, 0, 1, 1], [], []>} : vector<2x32xf32>, vector<32x32xf32>, vector<2x32xf32> -> vector<2x32xf32>
    %63 = arith.addf %61, %62 : vector<2x32xf32>
    %64 = math.tanh %63 : vector<2x32xf32>
    %cst_31 = arith.constant dense<0.000000e+00> : vector<2x32xf32>
    %65 = tpu.matmul %26, %42, %cst_31 {dimension_numbers = #tpu.dot_dimension_numbers<[1], [0], [0], [1], [0, 0, 1, 1], [], []>} : vector<2x32xf32>, vector<32x32xf32>, vector<2x32xf32> -> vector<2x32xf32>
    %66 = arith.addf %65, %46 : vector<2x32xf32>
    %cst_32 = arith.constant dense<0.000000e+00> : vector<2x32xf32>
    %67 = tpu.matmul %64, %40, %cst_32 {dimension_numbers = #tpu.dot_dimension_numbers<[1], [0], [0], [1], [0, 0, 1, 1], [], []>} : vector<2x32xf32>, vector<32x32xf32>, vector<2x32xf32> -> vector<2x32xf32>
    %68 = arith.addf %66, %67 : vector<2x32xf32>
    %69 = math.tanh %68 : vector<2x32xf32>
    %cst_33 = arith.constant dense<0.000000e+00> : vector<2x32xf32>
    %70 = tpu.matmul %30, %42, %cst_33 {dimension_numbers = #tpu.dot_dimension_numbers<[1], [0], [0], [1], [0, 0, 1, 1], [], []>} : vector<2x32xf32>, vector<32x32xf32>, vector<2x32xf32> -> vector<2x32xf32>
    %71 = arith.addf %70, %46 : vector<2x32xf32>
    %cst_34 = arith.constant dense<0.000000e+00> : vector<2x32xf32>
    %72 = tpu.matmul %69, %40, %cst_34 {dimension_numbers = #tpu.dot_dimension_numbers<[1], [0], [0], [1], [0, 0, 1, 1], [], []>} : vector<2x32xf32>, vector<32x32xf32>, vector<2x32xf32> -> vector<2x32xf32>
    %73 = arith.addf %71, %72 : vector<2x32xf32>
    %74 = math.tanh %73 : vector<2x32xf32>
    %cst_35 = arith.constant dense<0.000000e+00> : vector<2x32xf32>
    %75 = tpu.matmul %34, %42, %cst_35 {dimension_numbers = #tpu.dot_dimension_numbers<[1], [0], [0], [1], [0, 0, 1, 1], [], []>} : vector<2x32xf32>, vector<32x32xf32>, vector<2x32xf32> -> vector<2x32xf32>
    %76 = arith.addf %75, %46 : vector<2x32xf32>
    %cst_36 = arith.constant dense<0.000000e+00> : vector<2x32xf32>
    %77 = tpu.matmul %74, %40, %cst_36 {dimension_numbers = #tpu.dot_dimension_numbers<[1], [0], [0], [1], [0, 0, 1, 1], [], []>} : vector<2x32xf32>, vector<32x32xf32>, vector<2x32xf32> -> vector<2x32xf32>
    %78 = arith.addf %76, %77 : vector<2x32xf32>
    %79 = math.tanh %78 : vector<2x32xf32>
    %cst_37 = arith.constant dense<0.000000e+00> : vector<2x32xf32>
    %80 = tpu.matmul %38, %42, %cst_37 {dimension_numbers = #tpu.dot_dimension_numbers<[1], [0], [0], [1], [0, 0, 1, 1], [], []>} : vector<2x32xf32>, vector<32x32xf32>, vector<2x32xf32> -> vector<2x32xf32>
    %81 = arith.addf %80, %46 : vector<2x32xf32>
    %cst_38 = arith.constant dense<0.000000e+00> : vector<2x32xf32>
    %82 = tpu.matmul %79, %40, %cst_38 {dimension_numbers = #tpu.dot_dimension_numbers<[1], [0], [0], [1], [0, 0, 1, 1], [], []>} : vector<2x32xf32>, vector<32x32xf32>, vector<2x32xf32> -> vector<2x32xf32>
    %83 = arith.addf %81, %82 : vector<2x32xf32>
    %84 = math.tanh %83 : vector<2x32xf32>
    %85 = tpu.concatenate %49, %54, %59, %64, %69, %74, %79, %84 in 0 : vector<2x32xf32>, vector<2x32xf32>, vector<2x32xf32>, vector<2x32xf32>, vector<2x32xf32>, vector<2x32xf32>, vector<2x32xf32>, vector<2x32xf32> -> vector<16x32xf32>
    %c0_39 = arith.constant 0 : index
    %c0_40 = arith.constant 0 : index
    %86 = vector.load %arg5[%c0_39, %c0_40] : memref<32x32xf32, #tpu.memory_space<vmem>>, vector<32x32xf32>
    %cst_41 = arith.constant dense<0.000000e+00> : vector<16x32xf32>
    %87 = tpu.matmul %85, %86, %cst_41 {dimension_numbers = #tpu.dot_dimension_numbers<[1], [0], [0], [1], [0, 0, 1, 1], [], []>} : vector<16x32xf32>, vector<32x32xf32>, vector<16x32xf32> -> vector<16x32xf32>
    %c0_42 = arith.constant 0 : index
    %c0_43 = arith.constant 0 : index
    %88 = vector.load %arg6[%c0_42, %c0_43] : memref<1x32xf32, #tpu.memory_space<vmem>>, vector<1x32xf32>
    %89 = vector.broadcast %88 : vector<1x32xf32> to vector<16x32xf32>
    %90 = arith.addf %87, %89 : vector<16x32xf32>
    %c0_44 = arith.constant 0 : index
    %c0_45 = arith.constant 0 : index
    %91 = vector.load %arg7[%c0_44, %c0_45] : memref<16x32xf32, #tpu.memory_space<vmem>>, vector<16x32xf32>
    tpu.vector_store %arg7[%c0_44, %c0_45], %90 {strides = array<i32>} : memref<16x32xf32, #tpu.memory_space<vmem>>, vector<16x32xf32>,
    return
  }
}

</mosaic_0001>

<llo_original>
// kernel: tpu_custom_call.1
$region0: #{tpu_custom_call.1}
  #allocation0 [shape = 'u32[]', space=smem, size = 0x4, offset = 0x4, fixed_abs, tag = 'smem constant byte address 0x4 - core index']
  #allocation1 [shape = 'u32[72,128]{1,0:T(1,128)}', space=vmem, size = 0x9000, scoped, tag = 'internal scratch']
  %s0 = inlined_call_operand.hbm [shape: f32[16,16], index: 0, kind: input, shape index: {}]
  %s1 = inlined_call_operand.hbm [shape: f32[16,32], index: 1, kind: input, shape index: {}]
  %s2 = inlined_call_operand.hbm [shape: f32[1,32,32], index: 2, kind: input, shape index: {}]
  %s3 = inlined_call_operand.hbm [shape: f32[2,32,32], index: 3, kind: input, shape index: {}]
  %s4 = inlined_call_operand.vmem [shape: f32[2,1,32], index: 4, kind: input, shape index: {}]
  %s5 = inlined_call_operand.hbm [shape: f32[32,32], index: 5, kind: input, shape index: {}]
  %s6 = inlined_call_operand.vmem [shape: f32[1,32], index: 6, kind: input, shape index: {}]
  %s7 = inlined_call_operand.hbm [shape: f32[16,32], index: 7, kind: output, shape index: {}]
  %s8 = sld [smem:[#allocation0]]
  $region58: #{tpu_custom_call.1} parent=0
    _
  %s10 = ssub.s32 1, %s8
  %s11 = scalar_select 0, %s10, %s8
  $region1: #{tpu_custom_call.1} parent=0
    #allocation2 [shape = 'u8[8192]{0}', space=vmem, size = 0x2000, scoped, tag = 'input window, operand 0, single buffered']
    #allocation3 [shape = 's32[1]{0}', space=sflag, size = 0x4, scoped, tag = 'scoped memory for tpu_custom_call.1']
    #allocation4 [shape = 's32[1]{0}', space=sflag, size = 0x4, scoped, tag = 'scoped memory for tpu_custom_call.1']
    #allocation5 [shape = 'u8[8192]{0}', space=vmem, size = 0x2000, scoped, tag = 'input window, operand 1, single buffered']
    #allocation6 [shape = 's32[1]{0}', space=sflag, size = 0x4, scoped, tag = 'scoped memory for tpu_custom_call.1']
    #allocation7 [shape = 'u8[16384]{0}', space=vmem, size = 0x4000, scoped, tag = 'input window, operand 2, single buffered']
    #allocation8 [shape = 'u8[32768]{0}', space=vmem, size = 0x8000, scoped, tag = 'input window, operand 3, single buffered']
    #allocation9 [shape = 's32[1]{0}', space=sflag, size = 0x4, scoped, tag = 'scoped memory for tpu_custom_call.1']
    #allocation10 [shape = 'u8[16384]{0}', space=vmem, size = 0x4000, scoped, tag = 'input window, operand 5, single buffered']
    #allocation11 [shape = 'u8[8192]{0}', space=vmem, size = 0x2000, scoped, tag = 'output window, operand 0, single buffered']
    %12 = vsyncpa [#allocation3], 0
    %13 = vsyncpa [#allocation6], 0
    %14 = vsyncpa [#allocation9], 0
    %15 = vsyncpa [#allocation4], 0
    // Predicated region
    $region2: #{tpu_custom_call.1} parent=1 // pred_check
      _
    $region3: #{tpu_custom_call.1} parent=1 // pred_check_branch
      %17 = sbr.rel (0) target = $region5
    $region4: #{tpu_custom_call.1} parent=1 // pred_region
      %19 = vsyncadd [#allocation3], 0
      %s20 = sshll.u32 %s0, 4
      %s21 = int_to_ptr.hbm [resolvable:$true] %s20
      %s22 = sshll.u32 [#allocation2], 4
      %s23 = int_to_ptr.vmem [resolvable:$true] %s22
      %28 = dma.hbm_to_vmem [thread:$0]  %s21, 256, %s23, [#allocation3], 128, 128, 8
    $region5: #{tpu_custom_call.1} parent=1 // pred_fallthru
      _
    // Predicated region
    $region6: #{tpu_custom_call.1} parent=1 // pred_check
      _
    $region7: #{tpu_custom_call.1} parent=1 // pred_check_branch
      %30 = sbr.rel (0) target = $region9
    $region8: #{tpu_custom_call.1} parent=1 // pred_region
      %32 = vsyncadd [#allocation6], 0
      %s33 = sshll.u32 %s1, 4
      %s34 = int_to_ptr.hbm [resolvable:$true] %s33
      %s35 = sshll.u32 [#allocation5], 4
      %s36 = int_to_ptr.vmem [resolvable:$true] %s35
      %41 = dma.hbm_to_vmem [thread:$0]  %s34, 256, %s36, [#allocation6], 128, 128, 8
    $region9: #{tpu_custom_call.1} parent=1 // pred_fallthru
      _
    // Predicated region
    $region10: #{tpu_custom_call.1} parent=1 // pred_check
      _
    $region11: #{tpu_custom_call.1} parent=1 // pred_check_branch
      %43 = sbr.rel (0) target = $region13
    $region12: #{tpu_custom_call.1} parent=1 // pred_region
      %45 = vsyncadd [#allocation6], 0
      %s46 = sshll.u32 %s2, 4
      %s47 = int_to_ptr.hbm [resolvable:$true] %s46
      %s48 = sshll.u32 [#allocation7], 4
      %s49 = int_to_ptr.vmem [resolvable:$true] %s48
      %54 = dma.hbm_to_vmem [thread:$0]  %s47, 512, %s49, [#allocation6], 128, 128, 8
    $region13: #{tpu_custom_call.1} parent=1 // pred_fallthru
      _
    // Predicated region
    $region14: #{tpu_custom_call.1} parent=1 // pred_check
      _
    $region15: #{tpu_custom_call.1} parent=1 // pred_check_branch
      %56 = sbr.rel (0) target = $region17
    $region16: #{tpu_custom_call.1} parent=1 // pred_region
      %58 = vsyncadd [#allocation9], 0
      %s59 = sshll.u32 %s3, 4
      %s60 = int_to_ptr.hbm [resolvable:$true] %s59
      %s61 = sshll.u32 [#allocation8], 4
      %s62 = int_to_ptr.vmem [resolvable:$true] %s61
      %67 = dma.hbm_to_vmem [thread:$0]  %s60, 1024, %s62, [#allocation9], 128, 128, 8
    $region17: #{tpu_custom_call.1} parent=1 // pred_fallthru
      _
    // Predicated region
    $region18: #{tpu_custom_call.1} parent=1 // pred_check
      _
    $region19: #{tpu_custom_call.1} parent=1 // pred_check_branch
      %69 = sbr.rel (0) target = $region21
    $region20: #{tpu_custom_call.1} parent=1 // pred_region
      _
    $region21: #{tpu_custom_call.1} parent=1 // pred_fallthru
      _
    // Predicated region
    $region22: #{tpu_custom_call.1} parent=1 // pred_check
      _
    $region23: #{tpu_custom_call.1} parent=1 // pred_check_branch
      %71 = sbr.rel (0) target = $region25
    $region24: #{tpu_custom_call.1} parent=1 // pred_region
      %73 = vsyncadd [#allocation9], 0
      %s74 = sshll.u32 %s5, 4
      %s75 = int_to_ptr.hbm [resolvable:$true] %s74
      %s76 = sshll.u32 [#allocation10], 4
      %s77 = int_to_ptr.vmem [resolvable:$true] %s76
      %82 = dma.hbm_to_vmem [thread:$0]  %s75, 512, %s77, [#allocation9], 128, 128, 8
    $region25: #{tpu_custom_call.1} parent=1 // pred_fallthru
      _
    // Predicated region
    $region26: #{tpu_custom_call.1} parent=1 // pred_check
      _
    $region27: #{tpu_custom_call.1} parent=1 // pred_check_branch
      %84 = sbr.rel (0) target = $region29
    $region28: #{tpu_custom_call.1} parent=1 // pred_region
      _
    $region29: #{tpu_custom_call.1} parent=1 // pred_fallthru
      _
    // Predicated region
    $region30: #{tpu_custom_call.1} parent=1 // pred_check
      _
    $region31: #{tpu_custom_call.1} parent=1 // pred_check_branch
      %86 = sbr.rel (0) target = $region33
    $region32: #{tpu_custom_call.1} parent=1 // pred_region
      %88 = dma.done [#allocation3], 256
    $region33: #{tpu_custom_call.1} parent=1 // pred_fallthru
      _
    // Predicated region
    $region34: #{tpu_custom_call.1} parent=1 // pred_check
      _
    $region35: #{tpu_custom_call.1} parent=1 // pred_check_branch
      %90 = sbr.rel (0) target = $region37
    $region36: #{tpu_custom_call.1} parent=1 // pred_region
      %92 = dma.done [#allocation6], 256
    $region37: #{tpu_custom_call.1} parent=1 // pred_fallthru
      _
    // Predicated region
    $region38: #{tpu_custom_call.1} parent=1 // pred_check
      _
    $region39: #{tpu_custom_call.1} parent=1 // pred_check_branch
      %94 = sbr.rel (0) target = $region41
    $region40: #{tpu_custom_call.1} parent=1 // pred_region
      %96 = dma.done [#allocation6], 512
    $region41: #{tpu_custom_call.1} parent=1 // pred_fallthru
      _
    // Predicated region
    $region42: #{tpu_custom_call.1} parent=1 // pred_check
      _
    $region43: #{tpu_custom_call.1} parent=1 // pred_check_branch
      %98 = sbr.rel (0) target = $region45
    $region44: #{tpu_custom_call.1} parent=1 // pred_region
      %100 = dma.done [#allocation9], 1024
    $region45: #{tpu_custom_call.1} parent=1 // pred_fallthru
      _
    // Predicated region
    $region46: #{tpu_custom_call.1} parent=1 // pred_check
      _
    $region47: #{tpu_custom_call.1} parent=1 // pred_check_branch
      %102 = sbr.rel (0) target = $region49
    $region48: #{tpu_custom_call.1} parent=1 // pred_region
      %104 = dma.done [#allocation9], 512
    $region49: #{tpu_custom_call.1} parent=1 // pred_fallthru
      _
    %v105 = vld [vmem:[#allocation2] sm:$0xff]
    %v106 = vld [vmem:[#allocation2 + $0x8] sm:$0xff]
    %v107 = vld [vmem:[#allocation5] sm:$0xff]
    %v108 = vld [vmem:[#allocation5 + $0x8] sm:$0xff]
    %v109 = vld [vmem:[%s4] sm:$0x1]
    %v111 = vperm.slane %v109, 0
    %vm113 = vcmask 130048
    %v115 = vsel %vm113, %v105, 0
    %v118 = vsel %vm113, %v106, 0
    %120 = vmatpush.msra.mxu0 0.0
    %121 = vmatpush.msra.mxu0 0.0
    %122 = vmatpush.msra.mxu0 0.0
    %123 = vmatpush.msra.mxu0 0.0
    %124 = vmatpush.msra.mxu0 0.0
    %125 = vmatpush.msra.mxu0 0.0
    %126 = vmatpush.msra.mxu0 0.0
    %127 = vmatpush.msra.mxu0 0.0
    %128 = vmatpush.msra.mxu0 0.0
    %129 = vmatpush.msra.mxu0 0.0
    %130 = vmatpush.msra.mxu0 0.0
    %131 = vmatpush.msra.mxu0 0.0
    %132 = vmatpush.msra.mxu0 0.0
    %133 = vmatpush.msra.mxu0 0.0
    %134 = vmatpush.msra.mxu0 %v108
    %135 = vmatpush.msra.mxu0 %v107
    %136 = vmatmul.f32.gmra.mxu0 %v115
    %v137 = vpop.f32.mrf.mxu0
    %v138 = vadd.f32 %v111, %v137
    %139 = vmatmul.f32.gmra.mxu0 %v118
    %v140 = vpop.f32.mrf.mxu0
    %v141 = vadd.f32 %v111, %v140
    %142 = vdwg.mxu0
    %v143 = vld [vmem:[#allocation8] sm:$0xff]
    %v144 = vld [vmem:[#allocation8 + $0x8] sm:$0xff]
    %v145 = vld [vmem:[#allocation8 + $0x10] sm:$0xff]
    %v146 = vld [vmem:[#allocation8 + $0x18] sm:$0xff]
    %v147 = vtanh.pop %v138
    %vm148 = vcmask 261120
    %v150 = vsel %vm148, %v147, 0
    %152 = vmatpush.msra.mxu0 0.0
    %153 = vmatpush.msra.mxu0 0.0
    %154 = vmatpush.msra.mxu0 0.0
    %155 = vmatpush.msra.mxu0 0.0
    %156 = vmatpush.msra.mxu0 0.0
    %157 = vmatpush.msra.mxu0 0.0
    %158 = vmatpush.msra.mxu0 0.0
    %159 = vmatpush.msra.mxu0 0.0
    %160 = vmatpush.msra.mxu0 0.0
    %161 = vmatpush.msra.mxu0 0.0
    %162 = vmatpush.msra.mxu0 0.0
    %163 = vmatpush.msra.mxu0 0.0
    %164 = vmatpush.msra.mxu0 %v146
    %165 = vmatpush.msra.mxu0 %v145
    %166 = vmatpush.msra.mxu0 %v144
    %167 = vmatpush.msra.mxu0 %v143
    %168 = vmatmul.f32.gmra.mxu0 %v150
    %v169 = vpop.f32.mrf.mxu0
    %v170 = vadd.f32 0.0, %v169
    %171 = vdwg.mxu0
    %v173 = vrot.slane %v170, 6
    %v175 = vadd.f32 %v138, %v173
    %v176 = vtanh.pop %v175
    %v178 = vrot.slane %v176, 2
    %v179 = vsel %vm148, %v178, 0
    %181 = vmatpush.msra.mxu0 0.0
    %182 = vmatpush.msra.mxu0 0.0
    %183 = vmatpush.msra.mxu0 0.0
    %184 = vmatpush.msra.mxu0 0.0
    %185 = vmatpush.msra.mxu0 0.0
    %186 = vmatpush.msra.mxu0 0.0
    %187 = vmatpush.msra.mxu0 0.0
    %188 = vmatpush.msra.mxu0 0.0
    %189 = vmatpush.msra.mxu0 0.0
    %190 = vmatpush.msra.mxu0 0.0
    %191 = vmatpush.msra.mxu0 0.0
    %192 = vmatpush.msra.mxu0 0.0
    %193 = vmatpush.msra.mxu0 %v146
    %194 = vmatpush.msra.mxu0 %v145
    %195 = vmatpush.msra.mxu0 %v144
    %196 = vmatpush.msra.mxu0 %v143
    %197 = vmatmul.f32.gmra.mxu0 %v179
    %v198 = vpop.f32.mrf.mxu0
    %v199 = vadd.f32 0.0, %v198
    %200 = vdwg.mxu0
    %v202 = vrot.slane %v199, 4
    %v204 = vadd.f32 %v138, %v202
    %v205 = vtanh.pop %v204
    %v207 = vrot.slane %v205, 4
    %v208 = vsel %vm148, %v207, 0
    %210 = vmatpush.msra.mxu0 0.0
    %211 = vmatpush.msra.mxu0 0.0
    %212 = vmatpush.msra.mxu0 0.0
    %213 = vmatpush.msra.mxu0 0.0
    %214 = vmatpush.msra.mxu0 0.0
    %215 = vmatpush.msra.mxu0 0.0
    %216 = vmatpush.msra.mxu0 0.0
    %217 = vmatpush.msra.mxu0 0.0
    %218 = vmatpush.msra.mxu0 0.0
    %219 = vmatpush.msra.mxu0 0.0
    %220 = vmatpush.msra.mxu0 0.0
    %221 = vmatpush.msra.mxu0 0.0
    %222 = vmatpush.msra.mxu0 %v146
    %223 = vmatpush.msra.mxu0 %v145
    %224 = vmatpush.msra.mxu0 %v144
    %225 = vmatpush.msra.mxu0 %v143
    %226 = vmatmul.f32.gmra.mxu0 %v208
    %v227 = vpop.f32.mrf.mxu0
    %v228 = vadd.f32 0.0, %v227
    %229 = vdwg.mxu0
    %v231 = vrot.slane %v228, 2
    %v233 = vadd.f32 %v138, %v231
    %v234 = vtanh.pop %v233
    %v236 = vrot.slane %v234, 6
    %v237 = vsel %vm148, %v236, 0
    %239 = vmatpush.msra.mxu0 0.0
    %240 = vmatpush.msra.mxu0 0.0
    %241 = vmatpush.msra.mxu0 0.0
    %242 = vmatpush.msra.mxu0 0.0
    %243 = vmatpush.msra.mxu0 0.0
    %244 = vmatpush.msra.mxu0 0.0
    %245 = vmatpush.msra.mxu0 0.0
    %246 = vmatpush.msra.mxu0 0.0
    %247 = vmatpush.msra.mxu0 0.0
    %248 = vmatpush.msra.mxu0 0.0
    %249 = vmatpush.msra.mxu0 0.0
    %250 = vmatpush.msra.mxu0 0.0
    %251 = vmatpush.msra.mxu0 %v146
    %252 = vmatpush.msra.mxu0 %v145
    %253 = vmatpush.msra.mxu0 %v144
    %254 = vmatpush.msra.mxu0 %v143
    %255 = vmatmul.f32.gmra.mxu0 %v237
    %v256 = vpop.f32.mrf.mxu0
    %v257 = vadd.f32 0.0, %v256
    %258 = vdwg.mxu0
    %v259 = vadd.f32 %v141, %v257
    %v260 = vtanh.pop %v259
    %v262 = vsel %vm148, %v260, 0
    %264 = vmatpush.msra.mxu0 0.0
    %265 = vmatpush.msra.mxu0 0.0
    %266 = vmatpush.msra.mxu0 0.0
    %267 = vmatpush.msra.mxu0 0.0
    %268 = vmatpush.msra.mxu0 0.0
    %269 = vmatpush.msra.mxu0 0.0
    %270 = vmatpush.msra.mxu0 0.0
    %271 = vmatpush.msra.mxu0 0.0
    %272 = vmatpush.msra.mxu0 0.0
    %273 = vmatpush.msra.mxu0 0.0
    %274 = vmatpush.msra.mxu0 0.0
    %275 = vmatpush.msra.mxu0 0.0
    %276 = vmatpush.msra.mxu0 %v146
    %277 = vmatpush.msra.mxu0 %v145
    %278 = vmatpush.msra.mxu0 %v144
    %279 = vmatpush.msra.mxu0 %v143
    %280 = vmatmul.f32.gmra.mxu0 %v262
    %v281 = vpop.f32.mrf.mxu0
    %v282 = vadd.f32 0.0, %v281
    %283 = vdwg.mxu0
    %v285 = vrot.slane %v282, 6
    %v287 = vadd.f32 %v141, %v285
    %v288 = vtanh.pop %v287
    %v290 = vrot.slane %v288, 2
    %v291 = vsel %vm148, %v290, 0
    %293 = vmatpush.msra.mxu0 0.0
    %294 = vmatpush.msra.mxu0 0.0
    %295 = vmatpush.msra.mxu0 0.0
    %296 = vmatpush.msra.mxu0 0.0
    %297 = vmatpush.msra.mxu0 0.0
    %298 = vmatpush.msra.mxu0 0.0
    %299 = vmatpush.msra.mxu0 0.0
    %300 = vmatpush.msra.mxu0 0.0
    %301 = vmatpush.msra.mxu0 0.0
    %302 = vmatpush.msra.mxu0 0.0
    %303 = vmatpush.msra.mxu0 0.0
    %304 = vmatpush.msra.mxu0 0.0
    %305 = vmatpush.msra.mxu0 %v146
    %306 = vmatpush.msra.mxu0 %v145
    %307 = vmatpush.msra.mxu0 %v144
    %308 = vmatpush.msra.mxu0 %v143
    %309 = vmatmul.f32.gmra.mxu0 %v291
    %v310 = vpop.f32.mrf.mxu0
    %v311 = vadd.f32 0.0, %v310
    %312 = vdwg.mxu0
    %v314 = vrot.slane %v311, 4
    %v316 = vadd.f32 %v141, %v314
    %v317 = vtanh.pop %v316
    %v319 = vrot.slane %v317, 4
    %v320 = vsel %vm148, %v319, 0
    %322 = vmatpush.msra.mxu0 0.0
    %323 = vmatpush.msra.mxu0 0.0
    %324 = vmatpush.msra.mxu0 0.0
    %325 = vmatpush.msra.mxu0 0.0
    %326 = vmatpush.msra.mxu0 0.0
    %327 = vmatpush.msra.mxu0 0.0
    %328 = vmatpush.msra.mxu0 0.0
    %329 = vmatpush.msra.mxu0 0.0
    %330 = vmatpush.msra.mxu0 0.0
    %331 = vmatpush.msra.mxu0 0.0
    %332 = vmatpush.msra.mxu0 0.0
    %333 = vmatpush.msra.mxu0 0.0
    %334 = vmatpush.msra.mxu0 %v146
    %335 = vmatpush.msra.mxu0 %v145
    %336 = vmatpush.msra.mxu0 %v144
    %337 = vmatpush.msra.mxu0 %v143
    %338 = vmatmul.f32.gmra.mxu0 %v320
    %v339 = vpop.f32.mrf.mxu0
    %v340 = vadd.f32 0.0, %v339
    %341 = vdwg.mxu0
    %v343 = vrot.slane %v340, 2
    %v345 = vadd.f32 %v141, %v343
    %v346 = vtanh.pop %v345
    %s347 = scalar_lea.vmem [#allocation8], 32
    %v348 = vld [vmem:[%s347] sm:$0xff]
    %v349 = vld [vmem:[%s347 + $0x8] sm:$0xff]
    %v350 = vld [vmem:[%s347 + $0x10] sm:$0xff]
    %v351 = vld [vmem:[%s347 + $0x18] sm:$0xff]
    %v352 = vld [vmem:[#allocation7] sm:$0xff]
    %v353 = vld [vmem:[#allocation7 + $0x8] sm:$0xff]
    %v354 = vld [vmem:[#allocation7 + $0x10] sm:$0xff]
    %v355 = vld [vmem:[#allocation7 + $0x18] sm:$0xff]
    %s356 = scalar_lea.vmem %s4, 1
    %v357 = vld [vmem:[%s356] sm:$0x1]
    %v359 = vperm.slane %v357, 0
    %361 = vmatpush.msra.mxu0 0.0
    %362 = vmatpush.msra.mxu0 0.0
    %363 = vmatpush.msra.mxu0 0.0
    %364 = vmatpush.msra.mxu0 0.0
    %365 = vmatpush.msra.mxu0 0.0
    %366 = vmatpush.msra.mxu0 0.0
    %367 = vmatpush.msra.mxu0 0.0
    %368 = vmatpush.msra.mxu0 0.0
    %369 = vmatpush.msra.mxu0 0.0
    %370 = vmatpush.msra.mxu0 0.0
    %371 = vmatpush.msra.mxu0 0.0
    %372 = vmatpush.msra.mxu0 0.0
    %373 = vmatpush.msra.mxu0 %v355
    %374 = vmatpush.msra.mxu0 %v354
    %375 = vmatpush.msra.mxu0 %v353
    %376 = vmatpush.msra.mxu0 %v352
    %377 = vmatmul.f32.gmra.mxu0 %v150
    %v378 = vpop.f32.mrf.mxu0
    %v379 = vadd.f32 %v359, %v378
    %380 = vdwg.mxu0
    %v381 = vtanh.pop %v379
    %382 = vmatpush.msra.mxu0 0.0
    %383 = vmatpush.msra.mxu0 0.0
    %384 = vmatpush.msra.mxu0 0.0
    %385 = vmatpush.msra.mxu0 0.0
    %386 = vmatpush.msra.mxu0 0.0
    %387 = vmatpush.msra.mxu0 0.0
    %388 = vmatpush.msra.mxu0 0.0
    %389 = vmatpush.msra.mxu0 0.0
    %390 = vmatpush.msra.mxu0 0.0
    %391 = vmatpush.msra.mxu0 0.0
    %392 = vmatpush.msra.mxu0 0.0
    %393 = vmatpush.msra.mxu0 0.0
    %394 = vmatpush.msra.mxu0 %v355
    %395 = vmatpush.msra.mxu0 %v354
    %396 = vmatpush.msra.mxu0 %v353
    %397 = vmatpush.msra.mxu0 %v352
    %398 = vmatmul.f32.gmra.mxu0 %v179
    %v399 = vpop.f32.mrf.mxu0
    %v400 = vadd.f32 %v359, %v399
    %401 = vdwg.mxu0
    %v403 = vsel %vm148, %v381, 0
    %405 = vmatpush.msra.mxu0 0.0
    %406 = vmatpush.msra.mxu0 0.0
    %407 = vmatpush.msra.mxu0 0.0
    %408 = vmatpush.msra.mxu0 0.0
    %409 = vmatpush.msra.mxu0 0.0
    %410 = vmatpush.msra.mxu0 0.0
    %411 = vmatpush.msra.mxu0 0.0
    %412 = vmatpush.msra.mxu0 0.0
    %413 = vmatpush.msra.mxu0 0.0
    %414 = vmatpush.msra.mxu0 0.0
    %415 = vmatpush.msra.mxu0 0.0
    %416 = vmatpush.msra.mxu0 0.0
    %417 = vmatpush.msra.mxu0 %v351
    %418 = vmatpush.msra.mxu0 %v350
    %419 = vmatpush.msra.mxu0 %v349
    %420 = vmatpush.msra.mxu0 %v348
    %421 = vmatmul.f32.gmra.mxu0 %v403
    %v422 = vpop.f32.mrf.mxu0
    %v423 = vadd.f32 0.0, %v422
    %424 = vdwg.mxu0
    %v425 = vadd.f32 %v400, %v423
    %v426 = vtanh.pop %v425
    %427 = vmatpush.msra.mxu0 0.0
    %428 = vmatpush.msra.mxu0 0.0
    %429 = vmatpush.msra.mxu0 0.0
    %430 = vmatpush.msra.mxu0 0.0
    %431 = vmatpush.msra.mxu0 0.0
    %432 = vmatpush.msra.mxu0 0.0
    %433 = vmatpush.msra.mxu0 0.0
    %434 = vmatpush.msra.mxu0 0.0
    %435 = vmatpush.msra.mxu0 0.0
    %436 = vmatpush.msra.mxu0 0.0
    %437 = vmatpush.msra.mxu0 0.0
    %438 = vmatpush.msra.mxu0 0.0
    %439 = vmatpush.msra.mxu0 %v355
    %440 = vmatpush.msra.mxu0 %v354
    %441 = vmatpush.msra.mxu0 %v353
    %442 = vmatpush.msra.mxu0 %v352
    %443 = vmatmul.f32.gmra.mxu0 %v208
    %v444 = vpop.f32.mrf.mxu0
    %v445 = vadd.f32 %v359, %v444
    %446 = vdwg.mxu0
    %v448 = vsel %vm148, %v426, 0
    %450 = vmatpush.msra.mxu0 0.0
    %451 = vmatpush.msra.mxu0 0.0
    %452 = vmatpush.msra.mxu0 0.0
    %453 = vmatpush.msra.mxu0 0.0
    %454 = vmatpush.msra.mxu0 0.0
    %455 = vmatpush.msra.mxu0 0.0
    %456 = vmatpush.msra.mxu0 0.0
    %457 = vmatpush.msra.mxu0 0.0
    %458 = vmatpush.msra.mxu0 0.0
    %459 = vmatpush.msra.mxu0 0.0
    %460 = vmatpush.msra.mxu0 0.0
    %461 = vmatpush.msra.mxu0 0.0
    %462 = vmatpush.msra.mxu0 %v351
    %463 = vmatpush.msra.mxu0 %v350
    %464 = vmatpush.msra.mxu0 %v349
    %465 = vmatpush.msra.mxu0 %v348
    %466 = vmatmul.f32.gmra.mxu0 %v448
    %v467 = vpop.f32.mrf.mxu0
    %v468 = vadd.f32 0.0, %v467
    %469 = vdwg.mxu0
    %v470 = vadd.f32 %v445, %v468
    %v471 = vtanh.pop %v470
    %472 = vmatpush.msra.mxu0 0.0
    %473 = vmatpush.msra.mxu0 0.0
    %474 = vmatpush.msra.mxu0 0.0
    %475 = vmatpush.msra.mxu0 0.0
    %476 = vmatpush.msra.mxu0 0.0
    %477 = vmatpush.msra.mxu0 0.0
    %478 = vmatpush.msra.mxu0 0.0
    %479 = vmatpush.msra.mxu0 0.0
    %480 = vmatpush.msra.mxu0 0.0
    %481 = vmatpush.msra.mxu0 0.0
    %482 = vmatpush.msra.mxu0 0.0
    %483 = vmatpush.msra.mxu0 0.0
    %484 = vmatpush.msra.mxu0 %v355
    %485 = vmatpush.msra.mxu0 %v354
    %486 = vmatpush.msra.mxu0 %v353
    %487 = vmatpush.msra.mxu0 %v352
    %488 = vmatmul.f32.gmra.mxu0 %v237
    %v489 = vpop.f32.mrf.mxu0
    %v490 = vadd.f32 %v359, %v489
    %491 = vdwg.mxu0
    %v493 = vsel %vm148, %v471, 0
    %495 = vmatpush.msra.mxu0 0.0
    %496 = vmatpush.msra.mxu0 0.0
    %497 = vmatpush.msra.mxu0 0.0
    %498 = vmatpush.msra.mxu0 0.0
    %499 = vmatpush.msra.mxu0 0.0
    %500 = vmatpush.msra.mxu0 0.0
    %501 = vmatpush.msra.mxu0 0.0
    %502 = vmatpush.msra.mxu0 0.0
    %503 = vmatpush.msra.mxu0 0.0
    %504 = vmatpush.msra.mxu0 0.0
    %505 = vmatpush.msra.mxu0 0.0
    %506 = vmatpush.msra.mxu0 0.0
    %507 = vmatpush.msra.mxu0 %v351
    %508 = vmatpush.msra.mxu0 %v350
    %509 = vmatpush.msra.mxu0 %v349
    %510 = vmatpush.msra.mxu0 %v348
    %511 = vmatmul.f32.gmra.mxu0 %v493
    %v512 = vpop.f32.mrf.mxu0
    %v513 = vadd.f32 0.0, %v512
    %514 = vdwg.mxu0
    %v515 = vadd.f32 %v490, %v513
    %v516 = vtanh.pop %v515
    %517 = vmatpush.msra.mxu0 0.0
    %518 = vmatpush.msra.mxu0 0.0
    %519 = vmatpush.msra.mxu0 0.0
    %520 = vmatpush.msra.mxu0 0.0
    %521 = vmatpush.msra.mxu0 0.0
    %522 = vmatpush.msra.mxu0 0.0
    %523 = vmatpush.msra.mxu0 0.0
    %524 = vmatpush.msra.mxu0 0.0
    %525 = vmatpush.msra.mxu0 0.0
    %526 = vmatpush.msra.mxu0 0.0
    %527 = vmatpush.msra.mxu0 0.0
    %528 = vmatpush.msra.mxu0 0.0
    %529 = vmatpush.msra.mxu0 %v355
    %530 = vmatpush.msra.mxu0 %v354
    %531 = vmatpush.msra.mxu0 %v353
    %532 = vmatpush.msra.mxu0 %v352
    %533 = vmatmul.f32.gmra.mxu0 %v262
    %v534 = vpop.f32.mrf.mxu0
    %v535 = vadd.f32 %v359, %v534
    %536 = vdwg.mxu0
    %v538 = vsel %vm148, %v516, 0
    %540 = vmatpush.msra.mxu0 0.0
    %541 = vmatpush.msra.mxu0 0.0
    %542 = vmatpush.msra.mxu0 0.0
    %543 = vmatpush.msra.mxu0 0.0
    %544 = vmatpush.msra.mxu0 0.0
    %545 = vmatpush.msra.mxu0 0.0
    %546 = vmatpush.msra.mxu0 0.0
    %547 = vmatpush.msra.mxu0 0.0
    %548 = vmatpush.msra.mxu0 0.0
    %549 = vmatpush.msra.mxu0 0.0
    %550 = vmatpush.msra.mxu0 0.0
    %551 = vmatpush.msra.mxu0 0.0
    %552 = vmatpush.msra.mxu0 %v351
    %553 = vmatpush.msra.mxu0 %v350
    %554 = vmatpush.msra.mxu0 %v349
    %555 = vmatpush.msra.mxu0 %v348
    %556 = vmatmul.f32.gmra.mxu0 %v538
    %v557 = vpop.f32.mrf.mxu0
    %v558 = vadd.f32 0.0, %v557
    %559 = vdwg.mxu0
    %v560 = vadd.f32 %v535, %v558
    %v561 = vtanh.pop %v560
    %562 = vmatpush.msra.mxu0 0.0
    %563 = vmatpush.msra.mxu0 0.0
    %564 = vmatpush.msra.mxu0 0.0
    %565 = vmatpush.msra.mxu0 0.0
    %566 = vmatpush.msra.mxu0 0.0
    %567 = vmatpush.msra.mxu0 0.0
    %568 = vmatpush.msra.mxu0 0.0
    %569 = vmatpush.msra.mxu0 0.0
    %570 = vmatpush.msra.mxu0 0.0
    %571 = vmatpush.msra.mxu0 0.0
    %572 = vmatpush.msra.mxu0 0.0
    %573 = vmatpush.msra.mxu0 0.0
    %574 = vmatpush.msra.mxu0 %v355
    %575 = vmatpush.msra.mxu0 %v354
    %576 = vmatpush.msra.mxu0 %v353
    %577 = vmatpush.msra.mxu0 %v352
    %578 = vmatmul.f32.gmra.mxu0 %v291
    %v579 = vpop.f32.mrf.mxu0
    %v580 = vadd.f32 %v359, %v579
    %581 = vdwg.mxu0
    %v583 = vsel %vm148, %v561, 0
    %585 = vmatpush.msra.mxu0 0.0
    %586 = vmatpush.msra.mxu0 0.0
    %587 = vmatpush.msra.mxu0 0.0
    %588 = vmatpush.msra.mxu0 0.0
    %589 = vmatpush.msra.mxu0 0.0
    %590 = vmatpush.msra.mxu0 0.0
    %591 = vmatpush.msra.mxu0 0.0
    %592 = vmatpush.msra.mxu0 0.0
    %593 = vmatpush.msra.mxu0 0.0
    %594 = vmatpush.msra.mxu0 0.0
    %595 = vmatpush.msra.mxu0 0.0
    %596 = vmatpush.msra.mxu0 0.0
    %597 = vmatpush.msra.mxu0 %v351
    %598 = vmatpush.msra.mxu0 %v350
    %599 = vmatpush.msra.mxu0 %v349
    %600 = vmatpush.msra.mxu0 %v348
    %601 = vmatmul.f32.gmra.mxu0 %v583
    %v602 = vpop.f32.mrf.mxu0
    %v603 = vadd.f32 0.0, %v602
    %604 = vdwg.mxu0
    %v605 = vadd.f32 %v580, %v603
    %v606 = vtanh.pop %v605
    %607 = vmatpush.msra.mxu0 0.0
    %608 = vmatpush.msra.mxu0 0.0
    %609 = vmatpush.msra.mxu0 0.0
    %610 = vmatpush.msra.mxu0 0.0
    %611 = vmatpush.msra.mxu0 0.0
    %612 = vmatpush.msra.mxu0 0.0
    %613 = vmatpush.msra.mxu0 0.0
    %614 = vmatpush.msra.mxu0 0.0
    %615 = vmatpush.msra.mxu0 0.0
    %616 = vmatpush.msra.mxu0 0.0
    %617 = vmatpush.msra.mxu0 0.0
    %618 = vmatpush.msra.mxu0 0.0
    %619 = vmatpush.msra.mxu0 %v355
    %620 = vmatpush.msra.mxu0 %v354
    %621 = vmatpush.msra.mxu0 %v353
    %622 = vmatpush.msra.mxu0 %v352
    %623 = vmatmul.f32.gmra.mxu0 %v320
    %v624 = vpop.f32.mrf.mxu0
    %v625 = vadd.f32 %v359, %v624
    %626 = vdwg.mxu0
    %v628 = vsel %vm148, %v606, 0
    %630 = vmatpush.msra.mxu0 0.0
    %631 = vmatpush.msra.mxu0 0.0
    %632 = vmatpush.msra.mxu0 0.0
    %633 = vmatpush.msra.mxu0 0.0
    %634 = vmatpush.msra.mxu0 0.0
    %635 = vmatpush.msra.mxu0 0.0
    %636 = vmatpush.msra.mxu0 0.0
    %637 = vmatpush.msra.mxu0 0.0
    %638 = vmatpush.msra.mxu0 0.0
    %639 = vmatpush.msra.mxu0 0.0
    %640 = vmatpush.msra.mxu0 0.0
    %641 = vmatpush.msra.mxu0 0.0
    %642 = vmatpush.msra.mxu0 %v351
    %643 = vmatpush.msra.mxu0 %v350
    %644 = vmatpush.msra.mxu0 %v349
    %645 = vmatpush.msra.mxu0 %v348
    %646 = vmatmul.f32.gmra.mxu0 %v628
    %v647 = vpop.f32.mrf.mxu0
    %v648 = vadd.f32 0.0, %v647
    %649 = vdwg.mxu0
    %v650 = vadd.f32 %v625, %v648
    %v651 = vtanh.pop %v650
    %v653 = vrot.slane %v346, 6
    %v654 = vsel %vm148, %v653, 0
    %656 = vmatpush.msra.mxu0 0.0
    %657 = vmatpush.msra.mxu0 0.0
    %658 = vmatpush.msra.mxu0 0.0
    %659 = vmatpush.msra.mxu0 0.0
    %660 = vmatpush.msra.mxu0 0.0
    %661 = vmatpush.msra.mxu0 0.0
    %662 = vmatpush.msra.mxu0 0.0
    %663 = vmatpush.msra.mxu0 0.0
    %664 = vmatpush.msra.mxu0 0.0
    %665 = vmatpush.msra.mxu0 0.0
    %666 = vmatpush.msra.mxu0 0.0
    %667 = vmatpush.msra.mxu0 0.0
    %668 = vmatpush.msra.mxu0 %v355
    %669 = vmatpush.msra.mxu0 %v354
    %670 = vmatpush.msra.mxu0 %v353
    %671 = vmatpush.msra.mxu0 %v352
    %672 = vmatmul.f32.gmra.mxu0 %v654
    %v673 = vpop.f32.mrf.mxu0
    %v674 = vadd.f32 %v359, %v673
    %675 = vdwg.mxu0
    %v677 = vsel %vm148, %v651, 0
    %679 = vmatpush.msra.mxu0 0.0
    %680 = vmatpush.msra.mxu0 0.0
    %681 = vmatpush.msra.mxu0 0.0
    %682 = vmatpush.msra.mxu0 0.0
    %683 = vmatpush.msra.mxu0 0.0
    %684 = vmatpush.msra.mxu0 0.0
    %685 = vmatpush.msra.mxu0 0.0
    %686 = vmatpush.msra.mxu0 0.0
    %687 = vmatpush.msra.mxu0 0.0
    %688 = vmatpush.msra.mxu0 0.0
    %689 = vmatpush.msra.mxu0 0.0
    %690 = vmatpush.msra.mxu0 0.0
    %691 = vmatpush.msra.mxu0 %v351
    %692 = vmatpush.msra.mxu0 %v350
    %693 = vmatpush.msra.mxu0 %v349
    %694 = vmatpush.msra.mxu0 %v348
    %695 = vmatmul.f32.gmra.mxu0 %v677
    %v696 = vpop.f32.mrf.mxu0
    %v697 = vadd.f32 0.0, %v696
    %698 = vdwg.mxu0
    %v699 = vadd.f32 %v674, %v697
    %v700 = vtanh.pop %v699
    %v701 = vrot.slane %v426, 6
    %v703 = vrot.slane %v471, 4
    %v705 = vrot.slane %v516, 2
    %v707 = vrot.slane %v606, 6
    %v709 = vrot.slane %v651, 4
    %v712 = vrot.slane %v700, 2
    %vm714 = vcmask 1041408
    %v715 = vsel %vm714, %v381, %v701
    %vm716 = vcmask 1043456
    %v717 = vsel %vm716, %v715, %v703
    %vm718 = vcmask 1045504
    %v719 = vsel %vm718, %v717, %v705
    %v720 = vsel %vm714, %v561, %v707
    %v721 = vsel %vm716, %v720, %v709
    %v722 = vsel %vm718, %v721, %v712
    %v723 = vld [vmem:[#allocation10] sm:$0xff]
    %v724 = vld [vmem:[#allocation10 + $0x8] sm:$0xff]
    %v725 = vld [vmem:[#allocation10 + $0x10] sm:$0xff]
    %v726 = vld [vmem:[#allocation10 + $0x18] sm:$0xff]
    %v727 = vld [vmem:[%s6] sm:$0x1]
    %v729 = vperm.slane %v727, 0
    %v732 = vsel %vm148, %v719, 0
    %v735 = vsel %vm148, %v722, 0
    %737 = vmatpush.msra.mxu0 0.0
    %738 = vmatpush.msra.mxu0 0.0
    %739 = vmatpush.msra.mxu0 0.0
    %740 = vmatpush.msra.mxu0 0.0
    %741 = vmatpush.msra.mxu0 0.0
    %742 = vmatpush.msra.mxu0 0.0
    %743 = vmatpush.msra.mxu0 0.0
    %744 = vmatpush.msra.mxu0 0.0
    %745 = vmatpush.msra.mxu0 0.0
    %746 = vmatpush.msra.mxu0 0.0
    %747 = vmatpush.msra.mxu0 0.0
    %748 = vmatpush.msra.mxu0 0.0
    %749 = vmatpush.msra.mxu0 %v726
    %750 = vmatpush.msra.mxu0 %v725
    %751 = vmatpush.msra.mxu0 %v724
    %752 = vmatpush.msra.mxu0 %v723
    %753 = vmatmul.f32.gmra.mxu0 %v732
    %v754 = vpop.f32.mrf.mxu0
    %v755 = vadd.f32 %v729, %v754
    %756 = vmatmul.f32.gmra.mxu0 %v735
    %v757 = vpop.f32.mrf.mxu0
    %v758 = vadd.f32 %v729, %v757
    %759 = vdwg.mxu0
    %760 = vst.msk [vmem:[#allocation11] sm:$0xff] %vm148, %v755
    %761 = vst.msk [vmem:[#allocation11 + $0x8] sm:$0xff] %vm148, %v758
    // Predicated region
    $region50: #{tpu_custom_call.1} parent=1 // pred_check
      _
    $region51: #{tpu_custom_call.1} parent=1 // pred_check_branch
      %763 = sbr.rel (0) target = $region53
    $region52: #{tpu_custom_call.1} parent=1 // pred_region
      %765 = vsyncadd [#allocation4], 0
      %s766 = sshll.u32 [#allocation11], 4
      %s767 = int_to_ptr.vmem [resolvable:$true] %s766
      %s768 = sshll.u32 %s7, 4
      %s769 = int_to_ptr.hbm [resolvable:$true] %s768
      %774 = dma.vmem_to_hbm [thread:$0]  %s767, 256, %s769, [#allocation4], 128, 128, 8
    $region53: #{tpu_custom_call.1} parent=1 // pred_fallthru
      _
    // Predicated region
    $region54: #{tpu_custom_call.1} parent=1 // pred_check
      _
    $region55: #{tpu_custom_call.1} parent=1 // pred_check_branch
      %776 = sbr.rel (0) target = $region57
    $region56: #{tpu_custom_call.1} parent=1 // pred_region
      %778 = dma.done [#allocation4], 256
    $region57: #{tpu_custom_call.1} parent=1 // pred_fallthru
      _
    %779 = vsyncpa [#allocation3], 1
    %780 = vsyncpa [#allocation6], 1
    %781 = vsyncpa [#allocation9], 1
    %782 = vsyncpa [#allocation4], 1

</llo_original>
